<compile_context>
chip_gen: v5e
topology: v5e:2x2
jax: 0.10.0
libtpu: 0.0.40
codegen_flags: <defaults>
</compile_context>

<pallas_src>
import jax
import jax.numpy as jnp
from jax.experimental import pallas as pl
from jax.experimental.pallas import tpu as pltpu


def _build_pe_table(d_model: int, max_seq_len: int) -> jnp.ndarray:
    """Reproduce the PyTorch double loop exactly (float32).

    Note the module's quirky exponents: sin uses 2*i, cos uses 2*(i+1).
    Requires even d_model (the PyTorch code itself index-errors otherwise).
    """
    assert d_model % 2 == 0, "PositionalEncoder requires an even d_model"
    pos = jnp.arange(max_seq_len, dtype=jnp.float32)[:, None]          # (L, 1)
    i_even = jnp.arange(0, d_model, 2, dtype=jnp.float32)[None, :]     # (1, D/2)
    sin_div = jnp.power(10000.0, 2.0 * i_even / d_model)
    cos_div = jnp.power(10000.0, 2.0 * (i_even + 1.0) / d_model)
    pe_sin = jnp.sin(pos / sin_div)                                    # (L, D/2)
    pe_cos = jnp.cos(pos / cos_div)                                    # (L, D/2)
    pe = jnp.stack([pe_sin, pe_cos], axis=-1).reshape(max_seq_len, d_model)
    return pe.astype(jnp.float32)


def _sublane_multiple(itemsize: int) -> int:
    # f32 -> 8, bf16 -> 16, int8/fp8 -> 32 (sub-32-bit dtypes pack along sublanes).
    return max(8, 32 // itemsize)


def _choose_lane_width(total: int, cap: int = 2048):
    """Largest multiple of 128 dividing `total` (capped); None if no divisor."""
    best = None
    w = 128
    while w <= min(total, cap):
        if total % w == 0:
            best = w
        w += 128
    return best


def _choose_row_tile(num_rows: int, row_bytes: int, sublane: int,
                     target_bytes: int = 2 << 20) -> int:
    """Row tile: ~2 MiB block, multiple of the sublane pack (or full row count)."""
    if num_rows <= sublane:
        return num_rows
    t = max(sublane, (target_bytes // row_bytes) // sublane * sublane)
    return min(t, (num_rows // sublane) * sublane)


def _pos_enc_kernel(alpha_ref, x_ref, pe_ref, o_ref):
    # alpha_ref: (1, 1) in SMEM; x_ref / pe_ref / o_ref: (TILE_R, W) in VMEM
    # (batch dim squeezed out of x/o blocks).  Shape-matched fused add.
    alpha = alpha_ref[0, 0]
    o_ref[...] = (x_ref[...] + alpha * pe_ref[...]).astype(o_ref.dtype)


def _run_kernel(x3: jnp.ndarray, pe2: jnp.ndarray,
                alpha2d: jnp.ndarray) -> jnp.ndarray:
    """x3: (B, R, W); pe2: (R, W) broadcast over B.  out = x3 + alpha * pe2."""
    B, R, W = x3.shape
    itemsize = jnp.dtype(x3.dtype).itemsize
    sublane = _sublane_multiple(itemsize)
    tile_r = _choose_row_tile(R, W * itemsize, sublane)
    num_r_tiles = pl.cdiv(R, tile_r)

    return pl.pallas_call(
        _pos_enc_kernel,
        out_shape=jax.ShapeDtypeStruct((B, R, W), x3.dtype),
        grid_spec=pltpu.PrefetchScalarGridSpec(
            num_scalar_prefetch=0,
            # B innermost: pe block index is constant in b -> pe block stays
            # resident in VMEM across the batch sweep (no re-streaming).
            grid=(num_r_tiles, B),
            in_specs=[
                pl.BlockSpec((1, 1), lambda rt, b: (0, 0),
                             memory_space=pltpu.SMEM),                 # alpha
                pl.BlockSpec((pl.Squeezed(), tile_r, W),
                             lambda rt, b: (b, rt, 0)),                # x
                pl.BlockSpec((tile_r, W),
                             lambda rt, b: (rt, 0)),                   # pe
            ],
            out_specs=pl.BlockSpec((pl.Squeezed(), tile_r, W),
                                   lambda rt, b: (b, rt, 0)),
        ),
        compiler_params=pltpu.CompilerParams(
            dimension_semantics=("parallel", "parallel"),
            vmem_limit_bytes=32 << 20),
    )(alpha2d, x3, pe2)


def positional_encoder_forward(x: jnp.ndarray,
                               pe_table: jnp.ndarray,
                               alpha: jnp.ndarray) -> jnp.ndarray:
    """x: (B, S, D); pe_table: (max_seq_len, D) f32; alpha: (1,) parameter."""
    B, S, D = x.shape
    # pe in x.dtype: halves pe HBM reads / VMEM footprint for bf16 models and
    # matches the PyTorch add's effective precision.
    pe = pe_table[:S, :].astype(x.dtype)                               # (S, D)
    alpha2d = jnp.reshape(alpha, (1, 1)).astype(jnp.float32)

    if D >= 128:
        # Direct path: stream x at its native layout -- no reshape, so no risk
        # of hidden HBM relayout copies.  Full-D blocks (unmasked stores when
        # D % 128 == 0; block dim == full array dim is always legal).
        return _run_kernel(x, pe, alpha2d)

    # D < 128: native layout would force masked vst.msk stores, so re-lay the
    # (S, D) plane into a lane-dense (R, W) slab (row-major, metadata-level
    # reshape; pe[s, d] pairing with x[b, s, d] preserved exactly).
    W = _choose_lane_width(S * D)
    if W is None:
        # No multiple-of-128 divisor of S*D: keep native layout (masked stores).
        # TODO(synk): pad D to 128 (or fold B into rows) for a lane-dense slab.
        return _run_kernel(x, pe, alpha2d)
    R = (S * D) // W
    out = _run_kernel(x.reshape(B, R, W), pe.reshape(R, W), alpha2d)
    return out.reshape(B, S, D)


def reference_forward(x, pe_table, alpha):
    S = x.shape[1]
    pe = pe_table[:S, :].astype(x.dtype)
    out = x.astype(jnp.float32) + alpha * pe.astype(jnp.float32)
    return out.astype(x.dtype)


if __name__ == "__main__":
    key = jax.random.PRNGKey(0)
    k1, k2, k3 = jax.random.split(key, 3)

    # Deterministic parameter init, matching nn.Parameter(torch.ones(1)).
    alpha = jnp.ones((1,), dtype=jnp.float32)

    # Case 1: small d_model (D < 128 -> lane-dense relayout path).
    d_model, max_seq_len, batch, seq = 32, 64, 2, 8
    pe_table = _build_pe_table(d_model, max_seq_len)
    x = jax.random.normal(k1, (batch, seq, d_model), dtype=jnp.float32)
    out = jax.block_until_ready(positional_encoder_forward(x, pe_table, alpha))
    ref = reference_forward(x, pe_table, alpha[0])
    assert out.shape == x.shape and out.dtype == x.dtype
    assert jnp.allclose(out, ref, atol=1e-5, rtol=1e-5)

    # Case 2: D % 128 == 0 -> direct (no-reshape) path, multi-tile with a
    # non-divisible row tail (exercises the masked tail-block path).
    d_model2 = 128
    pe_table2 = _build_pe_table(d_model2, 64)
    x2 = jax.random.normal(k2, (2, 24, d_model2), dtype=jnp.float32)
    out2 = jax.block_until_ready(positional_encoder_forward(x2, pe_table2, alpha))
    ref2 = reference_forward(x2, pe_table2, alpha[0])
    assert out2.shape == x2.shape and out2.dtype == x2.dtype
    assert jnp.allclose(out2, ref2, atol=1e-5, rtol=1e-5)

    # Case 3: bf16 inputs (pe cast to bf16, 16-row sublane rounding).
    x3 = jax.random.normal(k3, (2, 16, d_model2), dtype=jnp.bfloat16)
    out3 = jax.block_until_ready(positional_encoder_forward(x3, pe_table2, alpha))
    ref3 = reference_forward(x3, pe_table2, alpha[0])
    assert out3.shape == x3.shape and out3.dtype == jnp.bfloat16
    assert jnp.allclose(out3.astype(jnp.float32), ref3.astype(jnp.float32),
                        atol=2e-2, rtol=2e-2)

    print("KERNEL_OK")
</pallas_src>

<mosaic_0001>
module attributes {stable_mosaic.version = 11 : i64} {
  func.func @_pos_enc_kernel(%arg0: i32, %arg1: i32, %arg2: memref<1x1xf32, #tpu.memory_space<smem>>, %arg3: memref<1x1x256xf32, #tpu.memory_space<vmem>>, %arg4: memref<1x256xf32, #tpu.memory_space<vmem>>, %arg5: memref<1x1x256xf32, #tpu.memory_space<vmem>>) attributes {dimension_semantics = [#tpu.dimension_semantics<parallel>, #tpu.dimension_semantics<parallel>], iteration_bounds = array<i64: 1, 2>, scalar_prefetch = 0 : i64, scratch_operands = 0 : i64, tpu.core_type = #tpu.core_type<tc>, window_params = [{transform_indices = @transform_0, window_bounds = array<i64: 1, 1>}, {transform_indices = @transform_1, window_bounds = array<i64: 1, 1, 256>}, {transform_indices = @transform_2, window_bounds = array<i64: 1, 256>}, {transform_indices = @transform_3, window_bounds = array<i64: 1, 1, 256>}]} {
    %c0 = arith.constant 0 : index
    %c0_0 = arith.constant 0 : index
    %0 = memref.load %arg2[%c0, %c0_0] : memref<1x1xf32, #tpu.memory_space<smem>>
    %c0_1 = arith.constant 0 : index
    %c0_2 = arith.constant 0 : index
    %c0_3 = arith.constant 0 : index
    %1 = vector.load %arg3[%c0_1, %c0_2, %c0_3] : memref<1x1x256xf32, #tpu.memory_space<vmem>>, vector<1x1x256xf32>
    %2 = vector.shape_cast %1 : vector<1x1x256xf32> to vector<1x256xf32>
    %c0_4 = arith.constant 0 : index
    %c0_5 = arith.constant 0 : index
    %3 = vector.load %arg4[%c0_4, %c0_5] : memref<1x256xf32, #tpu.memory_space<vmem>>, vector<1x256xf32>
    %4 = vector.broadcast %0 : f32 to vector<1x256xf32>
    %5 = arith.mulf %4, %3 : vector<1x256xf32>
    %6 = arith.addf %2, %5 : vector<1x256xf32>
    %c0_6 = arith.constant 0 : index
    %c0_7 = arith.constant 0 : index
    %c0_8 = arith.constant 0 : index
    %7 = vector.load %arg5[%c0_6, %c0_7, %c0_8] : memref<1x1x256xf32, #tpu.memory_space<vmem>>, vector<1x1x256xf32>
    %8 = vector.shape_cast %7 : vector<1x1x256xf32> to vector<1x256xf32>
    %9 = vector.shape_cast %6 : vector<1x256xf32> to vector<1x1x256xf32>
    tpu.vector_store %arg5[%c0_6, %c0_7, %c0_8], %9 {strides = array<i32>} : memref<1x1x256xf32, #tpu.memory_space<vmem>>, vector<1x1x256xf32>,
    return
  }
  func.func @transform_0(%arg0: i32, %arg1: i32) -> (i32, i32) {
    %c0_i32 = arith.constant 0 : i32
    %c0_i32_0 = arith.constant 0 : i32
    %c0_i32_1 = arith.constant 0 : i32
    return %c0_i32, %c0_i32_0 : i32, i32
  }
  func.func @transform_1(%arg0: i32, %arg1: i32) -> (i32, i32, i32) {
    %c0_i32 = arith.constant 0 : i32
    %c0_i32_0 = arith.constant 0 : i32
    return %arg1, %arg0, %c0_i32 : i32, i32, i32
  }
  func.func @transform_2(%arg0: i32, %arg1: i32) -> (i32, i32) {
    %c0_i32 = arith.constant 0 : i32
    %c0_i32_0 = arith.constant 0 : i32
    return %arg0, %c0_i32 : i32, i32
  }
  func.func @transform_3(%arg0: i32, %arg1: i32) -> (i32, i32, i32) {
    %c0_i32 = arith.constant 0 : i32
    %c0_i32_0 = arith.constant 0 : i32
    return %arg1, %arg0, %c0_i32 : i32, i32, i32
  }
}

</mosaic_0001>

<llo_original>
// kernel: tpu_custom_call.1
$region0: #{tpu_custom_call.1}
  #allocation0 [shape = 'u32[]', space=smem, size = 0x4, offset = 0x4, fixed_abs, tag = 'smem constant byte address 0x4 - core index']
  #allocation1 [shape = 'u32[72,128]{1,0:T(1,128)}', space=vmem, size = 0x9000, scoped, tag = 'internal scratch']
  #allocation2 [shape = 'f32[1,1]{1,0:T(1,128)S(6)}', space=smem, size = 0x200, scoped, tag = 'scoped memory for tpu_custom_call.1']
  %s0 = inlined_call_operand.<no memory space> [shape: f32[1,1], index: 0, kind: input, shape index: {}]
  %s1 = inlined_call_operand.hbm [shape: f32[2,1,256], index: 1, kind: input, shape index: {}]
  %s2 = inlined_call_operand.vmem [shape: f32[1,256], index: 2, kind: input, shape index: {}]
  %s3 = inlined_call_operand.hbm [shape: f32[2,1,256], index: 3, kind: output, shape index: {}]
  %s4 = sld [smem:[#allocation0]]
  $region49: #{tpu_custom_call.1} parent=0
    _
  %s6 = ssub.s32 1, %s4
  %s7 = scalar_select 0, %s6, %s4
  %8 = sst [smem:[#allocation2]] %s0
  $region1: #{tpu_custom_call.1} parent=0
    #allocation3 [shape = 'u8[2048]{0}', space=vmem, size = 0x800, scoped, tag = 'input window, operand 1']
    #allocation4 [shape = 's32[2]{0}', space=sflag, size = 0x8, scoped, tag = 'scoped memory for tpu_custom_call.1']
    #allocation5 [shape = 's32[2]{0}', space=sflag, size = 0x8, scoped, tag = 'scoped memory for tpu_custom_call.1']
    #allocation6 [shape = 'u8[2048]{0}', space=vmem, size = 0x800, scoped, tag = 'output window, operand 0']
    %9 = vsyncpa [#allocation4], 0
    %s10 = scalar_lea.sflag [#allocation4], 1
    %11 = vsyncpa %s10, 0
    %12 = vsyncpa [#allocation5], 0
    %s13 = scalar_lea.sflag [#allocation5], 1
    %14 = vsyncpa %s13, 0
    loop: start=0, step=1, limit=4
    $region2: #{tpu_custom_call.1} parent=1 // loop_pre_header
      _
    $region3: #{tpu_custom_call.1} parent=1 // loop_header
      %s16 = sphi 0, %s20
      %p17 = scmp.ge.s32.totalorder %s16, 4
      %s23 = sphi 0, %s35
      %s24 = sphi 0, %s31
      %s25 = sphi 0, %s23
      %s26 = sphi 0, %s24
      %s27 = sphi 0, %s25
      %s28 = sphi 0, %s26
      %s36 = sphi 0, %s36
      %s38 = sphi 0, %s36
      %s39 = sphi 0, %s38
      %s53 = sphi 0, %s39
      %s61 = sphi 0, %s63
      %s64 = sphi 0, %s61
      %s65 = sphi 0, %s64
      %s81 = sphi 0, %s65
      %s87 = sphi 0, %s89
      %s90 = sphi 0, %s87
      %s91 = sphi 0, %s90
      %s107 = sphi 0, %s91
      %s115 = sphi 0, %s117
      %s118 = sphi 0, %s115
      %s119 = sphi 0, %s118
      %s135 = sphi 0, %s119
    $region4: #{tpu_custom_call.1} parent=1 // loop_header_branch
      %19 = sbr.rel (%p17) target = $region8
    $region5: #{tpu_custom_call.1} parent=1 // loop_body
      %s21 = ssub.s32 %s16, 1
      %s22 = ssub.s32 %s16, 2
      %s29 = sadd.s32 1, %s24
      %p30 = scmp.ge.s32.totalorder %s29, 2
      %s31 = scalar_select %p30, 0, %s29
      %s32 = sadd.s32 1, %s23
      %s33 = scalar_select %p30, %s32, %s23
      %p34 = scmp.ge.s32.totalorder %s33, 1
      %s35 = scalar_select %p34, 0, %s33
      %s37 = sadd.s32 %s36, 1
      %p40 = scmp.eq.s32.totalorder %s16, 1
      %p41 = scmp.ne.s32.totalorder %s36, %s38
      %p42 = scmp.eq.s32.totalorder %s16, 0
      %p43 = por %p41, %p42
      %p44 = scmp.ne.s32.totalorder %s36, %s38
      %p45 = scmp.eq.s32.totalorder %s21, 1
      %p46 = por %p44, %p45
      %p47 = scmp.ne.s32.totalorder %s38, %s39
      %p48 = scmp.eq.s32.totalorder %s21, 0
      %p49 = por %p47, %p48
      %p50 = scmp.ne.s32.totalorder %s38, %s39
      %p51 = scmp.eq.s32.totalorder %s22, 1
      %p52 = por %p50, %p51
      %p54 = scmp.ne.s32.totalorder %s39, %s53
      %p55 = scmp.eq.s32.totalorder %s22, 0
      %p56 = por %p54, %p55
      %s57 = ssub.s32 %s24, %s31
      %s58 = ssub.s32 %s23, %s35
      %s59 = sor.u32 %s57, %s58
      %p60 = scmp.eq.s32.totalorder %s59, 0
      %s62 = sadd.s32 %s61, 1
      %s63 = scalar_select %p60, %s61, %s62
      %p66 = pneg %p60
      %p67 = scmp.eq.s32.totalorder %s16, 1
      %p68 = por %p66, %p67
      %p69 = scmp.ne.s32.totalorder %s61, %s64
      %p70 = scmp.eq.s32.totalorder %s16, 0
      %p71 = por %p69, %p70
      %p72 = scmp.ne.s32.totalorder %s61, %s64
      %p73 = scmp.eq.s32.totalorder %s21, 1
      %p74 = por %p72, %p73
      %p75 = scmp.ne.s32.totalorder %s64, %s65
      %p76 = scmp.eq.s32.totalorder %s21, 0
      %p77 = por %p75, %p76
      %p78 = scmp.ne.s32.totalorder %s64, %s65
      %p79 = scmp.eq.s32.totalorder %s22, 1
      %p80 = por %p78, %p79
      %p82 = scmp.ne.s32.totalorder %s65, %s81
      %p83 = scmp.eq.s32.totalorder %s22, 0
      %p84 = por %p82, %p83
      %s85 = ssub.s32 %s23, %s35
      %p86 = scmp.eq.s32.totalorder %s85, 0
      %s88 = sadd.s32 %s87, 1
      %s89 = scalar_select %p86, %s87, %s88
      %p92 = pneg %p86
      %p93 = scmp.eq.s32.totalorder %s16, 1
      %p94 = por %p92, %p93
      %p95 = scmp.ne.s32.totalorder %s87, %s90
      %p96 = scmp.eq.s32.totalorder %s16, 0
      %p97 = por %p95, %p96
      %p98 = scmp.ne.s32.totalorder %s87, %s90
      %p99 = scmp.eq.s32.totalorder %s21, 1
      %p100 = por %p98, %p99
      %p101 = scmp.ne.s32.totalorder %s90, %s91
      %p102 = scmp.eq.s32.totalorder %s21, 0
      %p103 = por %p101, %p102
      %p104 = scmp.ne.s32.totalorder %s90, %s91
      %p105 = scmp.eq.s32.totalorder %s22, 1
      %p106 = por %p104, %p105
      %p108 = scmp.ne.s32.totalorder %s91, %s107
      %p109 = scmp.eq.s32.totalorder %s22, 0
      %p110 = por %p108, %p109
      %s111 = ssub.s32 %s24, %s31
      %s112 = ssub.s32 %s23, %s35
      %s113 = sor.u32 %s111, %s112
      %p114 = scmp.eq.s32.totalorder %s113, 0
      %s116 = sadd.s32 %s115, 1
      %s117 = scalar_select %p114, %s115, %s116
      %p120 = pneg %p114
      %p121 = scmp.eq.s32.totalorder %s16, 1
      %p122 = por %p120, %p121
      %p123 = scmp.ne.s32.totalorder %s115, %s118
      %p124 = scmp.eq.s32.totalorder %s16, 0
      %p125 = por %p123, %p124
      %p126 = scmp.ne.s32.totalorder %s115, %s118
      %p127 = scmp.eq.s32.totalorder %s21, 1
      %p128 = por %p126, %p127
      %p129 = scmp.ne.s32.totalorder %s118, %s119
      %p130 = scmp.eq.s32.totalorder %s21, 0
      %p131 = por %p129, %p130
      %p132 = scmp.ne.s32.totalorder %s118, %s119
      %p133 = scmp.eq.s32.totalorder %s22, 1
      %p134 = por %p132, %p133
      %p136 = scmp.ne.s32.totalorder %s119, %s135
      %p137 = scmp.eq.s32.totalorder %s22, 0
      %p138 = por %p136, %p137
      %p139 = scmp.le.s32.totalorder 1, %s16
      %p140 = scmp.lt.s32.totalorder %s16, 3
      %p141 = pnand %p139, %p140
      %p142 = pneg %p141
      // Predicated region
      $region9: #{tpu_custom_call.1} parent=5 // pred_check
        _
      $region10: #{tpu_custom_call.1} parent=5 // pred_check_branch
        %144 = sbr.rel (%p141) target = $region12
      $region11: #{tpu_custom_call.1} parent=5 // pred_region
        %s145 = ssub.s32 %s16, 1
        // Predicated region
        $region13: #{tpu_custom_call.1} parent=11 // pred_check
          %p146 = pneg %p49
        $region14: #{tpu_custom_call.1} parent=11 // pred_check_branch
          %148 = sbr.rel (%p146) target = $region16
        $region15: #{tpu_custom_call.1} parent=11 // pred_region
          _
        $region16: #{tpu_custom_call.1} parent=11 // pred_fallthru
          _
        // Predicated region
        $region17: #{tpu_custom_call.1} parent=11 // pred_check
          %p149 = pneg %p103
        $region18: #{tpu_custom_call.1} parent=11 // pred_check_branch
          %151 = sbr.rel (%p149) target = $region20
        $region19: #{tpu_custom_call.1} parent=11 // pred_region
          %p152 = scmp.lt.s32.totalorder %s25, 0
          %s153 = scalar_select %p152, %s25, 0
          %s154 = smul.addr %s153, 2
          %s155 = scalar_lea.vmem %s2, %s154
        $region20: #{tpu_custom_call.1} parent=11 // pred_fallthru
          _
      $region12: #{tpu_custom_call.1} parent=5 // pred_fallthru
        _
      %p156 = scmp.lt.s32.totalorder %s16, 2
      // Predicated region
      $region21: #{tpu_custom_call.1} parent=5 // pred_check
        %p157 = pneg %p156
      $region22: #{tpu_custom_call.1} parent=5 // pred_check_branch
        %159 = sbr.rel (%p157) target = $region24
      $region23: #{tpu_custom_call.1} parent=5 // pred_region
        // Predicated region
        $region25: #{tpu_custom_call.1} parent=23 // pred_check
          %p160 = pneg %p71
        $region26: #{tpu_custom_call.1} parent=23 // pred_check_branch
          %162 = sbr.rel (%p160) target = $region28
        $region27: #{tpu_custom_call.1} parent=23 // pred_region
          %s163 = sand.u32 %s61, 1
          %s164 = scalar_lea.sflag [#allocation4], %s163
          %s165 = sand.u32 %s61, 1
          %s166 = smul.addr %s165, 2
          %s167 = scalar_lea.vmem [#allocation3], %s166
          %169 = vsyncadd %s164, 0
          %s170 = smul.addr %s23, 2
          %s171 = smul.addr %s24, 2
          %s172 = sadd.s32 %s170, %s171
          %s173 = scalar_lea.hbm %s1, %s172
          %s175 = sshll.u32 %s173, 4
          %s176 = int_to_ptr.hbm [resolvable:$true] %s175
          %s177 = sshll.u32 %s167, 4
          %s178 = int_to_ptr.vmem [resolvable:$true] %s177
          %180 = dma.hbm_to_vmem [thread:$0]  %s176, 32, %s178, %s164
        $region28: #{tpu_custom_call.1} parent=23 // pred_fallthru
          _
      $region24: #{tpu_custom_call.1} parent=5 // pred_fallthru
        _
      %p181 = scmp.le.s32.totalorder 1, %s16
      %p182 = scmp.lt.s32.totalorder %s16, 3
      %p183 = pnand %p181, %p182
      %p184 = pneg %p183
      // Predicated region
      $region29: #{tpu_custom_call.1} parent=5 // pred_check
        _
      $region30: #{tpu_custom_call.1} parent=5 // pred_check_branch
        %186 = sbr.rel (%p183) target = $region32
      $region31: #{tpu_custom_call.1} parent=5 // pred_region
        %s187 = ssub.s32 %s16, 1
        %s188 = sand.u32 %s64, 1
        %s189 = scalar_lea.sflag [#allocation4], %s188
        %s190 = sand.u32 %s64, 1
        %s191 = smul.addr %s190, 2
        %s192 = scalar_lea.vmem [#allocation3], %s191
        // Predicated region
        $region33: #{tpu_custom_call.1} parent=31 // pred_check
          %p193 = pneg %p77
        $region34: #{tpu_custom_call.1} parent=31 // pred_check_branch
          %195 = sbr.rel (%p193) target = $region36
        $region35: #{tpu_custom_call.1} parent=31 // pred_region
          %197 = dma.done %s189, 32
        $region36: #{tpu_custom_call.1} parent=31 // pred_fallthru
          _
        %p198 = pneg %p49
        %p199 = pneg %p46
        %s200 = sand.u32 %s64, 1
        %s201 = scalar_lea.sflag [#allocation4], %s200
        %s202 = sand.u32 %s64, 1
        %s203 = smul.addr %s202, 2
        %s204 = scalar_lea.vmem [#allocation3], %s203
        %p205 = pneg %p77
        %p206 = pneg %p74
        %p207 = scmp.lt.s32.totalorder %s25, 0
        %s208 = scalar_select %p207, %s25, 0
        %s209 = smul.addr %s208, 2
        %s210 = scalar_lea.vmem %s2, %s209
        %p211 = pneg %p103
        %p212 = pneg %p100
        %p213 = pneg %p131
        %p214 = pneg %p128
        %s215 = sand.u32 %s118, 1
        %s216 = scalar_lea.sflag [#allocation5], %s215
        %s217 = sand.u32 %s118, 1
        %s218 = smul.addr %s217, 2
        %s219 = scalar_lea.vmem [#allocation6], %s218
        %p220 = scmp.lt.s32.totalorder %s25, 0
        %s221 = scalar_select %p220, %s25, 0
        %s222 = smul.addr %s221, 2
        %s223 = scalar_lea.vmem %s2, %s222
        %s224 = sld [smem:[#allocation2]]
        %v225 = vld [vmem:[%s192] sm:$0x3]
        %v226 = vld [vmem:[%s223] sm:$0x3]
        %v227 = vstv %s224
        %v228 = vmul.f32 %v227, %v226
        %v229 = vadd.f32 %v225, %v228
        %v230 = vlaneseq
        %vm231 = vcmp.ge.s32.totalorder %v230, 0
        %vm232 = vcmp.lt.s32.totalorder %v230, 256
        %vm233 = vmand %vm231, %vm232
        %234 = vst.msk [vmem:[%s219] sm:$0x3] %vm233, %v229
        %s235 = sand.u32 %s118, 1
        %s236 = scalar_lea.sflag [#allocation5], %s235
        %s237 = sand.u32 %s118, 1
        %s238 = smul.addr %s237, 2
        %s239 = scalar_lea.vmem [#allocation6], %s238
        // Predicated region
        $region37: #{tpu_custom_call.1} parent=31 // pred_check
          %p240 = pneg %p128
        $region38: #{tpu_custom_call.1} parent=31 // pred_check_branch
          %242 = sbr.rel (%p240) target = $region40
        $region39: #{tpu_custom_call.1} parent=31 // pred_region
          %244 = vsyncadd %s236, 0
          %s245 = smul.addr %s25, 2
          %s246 = smul.addr %s26, 2
          %s247 = sadd.s32 %s245, %s246
          %s248 = scalar_lea.hbm %s3, %s247
          %s250 = sshll.u32 %s239, 4
          %s251 = int_to_ptr.vmem [resolvable:$true] %s250
          %s252 = sshll.u32 %s248, 4
          %s253 = int_to_ptr.hbm [resolvable:$true] %s252
          %255 = dma.vmem_to_hbm [thread:$0]  %s251, 32, %s253, %s236
        $region40: #{tpu_custom_call.1} parent=31 // pred_fallthru
          _
      $region32: #{tpu_custom_call.1} parent=5 // pred_fallthru
        _
      %p256 = scmp.le.s32.totalorder 2, %s16
      // Predicated region
      $region41: #{tpu_custom_call.1} parent=5 // pred_check
        %p257 = pneg %p256
      $region42: #{tpu_custom_call.1} parent=5 // pred_check_branch
        %259 = sbr.rel (%p257) target = $region44
      $region43: #{tpu_custom_call.1} parent=5 // pred_region
        %s260 = ssub.s32 %s16, 2
        // Predicated region
        $region45: #{tpu_custom_call.1} parent=43 // pred_check
          %p261 = pneg %p134
        $region46: #{tpu_custom_call.1} parent=43 // pred_check_branch
          %263 = sbr.rel (%p261) target = $region48
        $region47: #{tpu_custom_call.1} parent=43 // pred_region
          %s264 = sand.u32 %s119, 1
          %s265 = scalar_lea.sflag [#allocation5], %s264
          %s266 = sand.u32 %s119, 1
          %s267 = smul.addr %s266, 2
          %s268 = scalar_lea.vmem [#allocation6], %s267
          %270 = dma.done %s265, 32
        $region48: #{tpu_custom_call.1} parent=43 // pred_fallthru
          _
      $region44: #{tpu_custom_call.1} parent=5 // pred_fallthru
        _
    $region6: #{tpu_custom_call.1} parent=1 // loop_footer
      %s20 = sadd.s32 1, %s16
    $region7: #{tpu_custom_call.1} parent=1 // loop_footer_branch
      %15 = sbr.rel target = $region3
    $region8: #{tpu_custom_call.1} parent=1 // loop_exit
      _
    %271 = vsyncpa [#allocation4], 1
    %s272 = scalar_lea.sflag [#allocation4], 1
    %273 = vsyncpa %s272, 1
    %274 = vsyncpa [#allocation5], 1
    %s275 = scalar_lea.sflag [#allocation5], 1
    %276 = vsyncpa %s275, 1

</llo_original>
